<compile_context>
chip_gen: v5e
topology: v5e:2x2
jax: 0.10.0
libtpu: 0.0.40
codegen_flags: <defaults>
</compile_context>

<pallas_src>
import functools

import numpy as np
import jax
import jax.numpy as jnp
from jax.experimental import pallas as pl
from jax.experimental.pallas import tpu as pltpu

EPS = 1e-5


# ----------------------------- Pallas kernels -----------------------------

def _lab_kernel(sb_ref, x_ref, o_ref):
    """LearnableAffineBlock: y = scale * x + bias.

    scale/bias live in SMEM as f32; elementwise math in f32; cast on store.
    """
    x = x_ref[...].astype(jnp.float32)
    o_ref[...] = (sb_ref[0] * x + sb_ref[1]).astype(o_ref.dtype)


def _fused_block_kernel(*refs, K, stride, use_se):
    """One grid step = one batch element: dw rep-conv (+hswish+LAB) -> SE -> pw rep-conv.

    Inputs (bf16 unless noted):
      x      : (1, H, W, C)
      w_dw   : (K*K, C)       fused depthwise kernel (rep branches + LAB scale folded)
      b_dw   : (1, C)  f32    fused depthwise bias   (+ LAB bias folded)
      [SE]   : w1 (C, Cr) f32, b1 (1, Cr) f32, w2 (Cr, C) f32, b2 (1, C) f32
      w_pw   : (C, Cout)      fused pointwise kernel (+ LAB scale folded)
      b_pw   : (1, Cout) f32
      act    : SMEM (4,) f32  [dw_act_scale, dw_act_bias, pw_act_scale, pw_act_bias]
    Output:
      out    : (1, Ho, Wo*Cout) bf16   (lane-dense slab)
    Scratch:
      xpad   : VMEM (H+2p, W+2p, C) f32
    """
    if use_se:
        (x_ref, wdw_ref, bdw_ref, w1_ref, b1_ref, w2_ref, b2_ref,
         wpw_ref, bpw_ref, act_ref, out_ref, xpad_ref) = refs
    else:
        (x_ref, wdw_ref, bdw_ref,
         wpw_ref, bpw_ref, act_ref, out_ref, xpad_ref) = refs

    _, H, W, C = x_ref.shape
    Cout = wpw_ref.shape[1]
    p = (K - 1) // 2
    Ho = (H + 2 * p - K) // stride + 1
    Wo = (W + 2 * p - K) // stride + 1

    # ---- in-kernel padding: interior copy + halo-only zeroing (no full-slab memset) ----
    xpad_ref[p:p + H, p:p + W, :] = x_ref[0].astype(jnp.float32)
    zrow = jnp.zeros((p, W + 2 * p, C), jnp.float32)
    zcol = jnp.zeros((H + 2 * p, p, C), jnp.float32)
    xpad_ref[0:p, :, :] = zrow
    xpad_ref[p + H:, :, :] = zrow
    xpad_ref[:, 0:p, :] = zcol
    xpad_ref[:, p + W:, :] = zcol

    # ---- depthwise KxK rep-conv; f32 elementwise math, LAB already folded ----
    # TODO(synk): lane-pack as (H, (W+2p)*C) and use pltpu.roll for the kj shifts.
    w_dw = wdw_ref[...].astype(jnp.float32)                        # (K*K, C)
    acc = jnp.zeros((Ho, Wo, C), jnp.float32)
    for ki in range(K):
        for kj in range(K):
            if stride == 1:
                patch = xpad_ref[ki:ki + Ho, kj:kj + Wo, :]
            else:
                # stride-2: load only the needed (decimated) positions.
                patch = xpad_ref[pl.ds(ki, Ho, stride),
                                 pl.ds(kj, Wo, stride), :]
            acc = acc + patch * w_dw[ki * K + kj][None, None, :]
    acc = acc + bdw_ref[...]                                        # (1, C) broadcast

    if stride != 2:                                                 # hardswish + act-LAB
        acc = acc * (jnp.clip(acc + 3.0, 0.0, 6.0) * (1.0 / 6.0))
        acc = act_ref[0] * acc + act_ref[1]

    # ---- SE, fully fused: pool + 2 tiny FCs + hardsigmoid gate (all in VMEM) ----
    if use_se:
        pooled = jnp.sum(acc, axis=0)                               # (Wo, C)
        pooled = jnp.sum(pooled, axis=0, keepdims=True) * (1.0 / (Ho * Wo))   # (1, C)
        h = jnp.dot(pooled, w1_ref[...],
                    preferred_element_type=jnp.float32) + b1_ref[...]
        h = jnp.maximum(h, 0.0)                                     # relu
        s = jnp.dot(h, w2_ref[...],
                    preferred_element_type=jnp.float32) + b2_ref[...]
        s = jnp.clip(s + 3.0, 0.0, 6.0) * (1.0 / 6.0)               # hardsigmoid
        acc = acc * s                                               # (1, C) broadcast

    # ---- pointwise 1x1 rep-conv: bf16 x bf16 -> f32 MXU matmul over M = Ho*Wo rows ----
    y2d = acc.reshape(Ho * Wo, C)
    z = jnp.dot(y2d.astype(jnp.bfloat16), wpw_ref[...],
                preferred_element_type=jnp.float32) + bpw_ref[...]
    z = z * (jnp.clip(z + 3.0, 0.0, 6.0) * (1.0 / 6.0))             # hardswish
    z = act_ref[2] * z + act_ref[3]                                 # post-act LAB
    # Lane-dense store: (Ho, Wo*Cout), last dim a multiple of 128.
    out_ref[0] = z.reshape(Ho, Wo * Cout).astype(out_ref.dtype)


# ----------------------------- pallas_call wrappers -----------------------------

def learnable_affine_block_forward(x, scale, bias, *, block_rows=512):
    """Tiled, gridded LAB on an arbitrary tensor.

    Flattens to a lane-dense (rows, lanes) layout (lanes up to 1024), pads to a
    multiple of (8, lanes) if needed, and runs a "parallel" grid of big blocks.
    scale/bias stay f32 in SMEM regardless of x.dtype.
    """
    orig_shape = x.shape
    flat = x.reshape(-1)
    n = int(flat.shape[0])

    lanes = 128
    for cand in (1024, 512, 256):
        if n % (8 * cand) == 0:
            lanes = cand
            break
    pad = (-n) % (8 * lanes)
    if pad:
        flat = jnp.concatenate([flat, jnp.zeros((pad,), flat.dtype)])
    rows = flat.shape[0] // lanes
    x2d = flat.reshape(rows, lanes)

    br = min(block_rows, rows)            # rows is a multiple of 8, so br is too
    grid = pl.cdiv(rows, br)

    sb = jnp.stack([jnp.asarray(scale, jnp.float32),
                    jnp.asarray(bias, jnp.float32)])

    out = pl.pallas_call(
        _lab_kernel,
        out_shape=jax.ShapeDtypeStruct(x2d.shape, x.dtype),
        grid=(grid,),
        in_specs=[pl.BlockSpec(memory_space=pltpu.MemorySpace.SMEM),
                  pl.BlockSpec((br, lanes), lambda i: (i, 0))],
        out_specs=pl.BlockSpec((br, lanes), lambda i: (i, 0)),
        compiler_params=pltpu.CompilerParams(dimension_semantics=("parallel",)),
        cost_estimate=pl.CostEstimate(
            flops=2 * n, transcendentals=0,
            bytes_accessed=2 * n * x.dtype.itemsize),
    )(sb, x2d)

    out = out.reshape(-1)
    if pad:
        out = out[:n]
    return out.reshape(orig_shape)


# ----------------------------- parameter setup (deterministic) -----------------------------

def _make_bn(key, c):
    k1, k2, k3, k4 = jax.random.split(key, 4)
    return dict(
        gamma=jax.random.uniform(k1, (c,), jnp.float32, 0.5, 1.5),
        beta=jax.random.normal(k2, (c,), jnp.float32) * 0.1,
        mean=jax.random.normal(k3, (c,), jnp.float32) * 0.1,
        var=jax.random.uniform(k4, (c,), jnp.float32, 0.5, 1.5),
    )


def _make_rep_layer_params(key, in_c, out_c, k, stride, groups, num_branches):
    it = iter(jax.random.split(key, 2 * num_branches + 8))
    p = {'kxk': []}
    for _ in range(num_branches):
        w = jax.random.normal(next(it), (out_c, in_c // groups, k, k), jnp.float32) * 0.2
        p['kxk'].append((w, _make_bn(next(it), out_c)))
    if k > 1:
        w = jax.random.normal(next(it), (out_c, in_c // groups, 1, 1), jnp.float32) * 0.2
        p['conv1x1'] = (w, _make_bn(next(it), out_c))
    else:
        p['conv1x1'] = None
    p['identity'] = _make_bn(next(it), in_c) if (out_c == in_c and stride == 1) else None
    p['lab'] = (1.0 + 0.1 * jax.random.normal(next(it), (), jnp.float32),
                0.1 * jax.random.normal(next(it), (), jnp.float32))
    p['act_lab'] = (1.0 + 0.1 * jax.random.normal(next(it), (), jnp.float32),
                    0.1 * jax.random.normal(next(it), (), jnp.float32))
    return p


def _make_se_params(key, c, reduction=4):
    k1, k2, k3, k4 = jax.random.split(key, 4)
    cr = c // reduction
    return dict(
        w1=jax.random.normal(k1, (cr, c, 1, 1), jnp.float32) * 0.2,
        b1=jax.random.normal(k2, (cr,), jnp.float32) * 0.1,
        w2=jax.random.normal(k3, (c, cr, 1, 1), jnp.float32) * 0.2,
        b2=jax.random.normal(k4, (c,), jnp.float32) * 0.1,
    )


def make_lcnetv3_block_params(key, in_c, out_c, stride, dw_size, use_se, conv_kxk_num=4):
    k1, k2, k3 = jax.random.split(key, 3)
    return dict(
        dw=_make_rep_layer_params(k1, in_c, in_c, dw_size, stride, in_c, conv_kxk_num),
        se=_make_se_params(k2, in_c) if use_se else None,
        pw=_make_rep_layer_params(k3, in_c, out_c, 1, 1, 1, conv_kxk_num),
    )


# ----------------------------- branch fusion glue (mirrors _get_kernel_bias) -----------------------------

def _fuse_conv_bn(w, bn):
    t = bn['gamma'] / jnp.sqrt(bn['var'] + EPS)
    return w * t[:, None, None, None], bn['beta'] - bn['mean'] * t


def _identity_kernel_bias(bn, in_c, groups, k):
    input_dim = in_c // groups
    idk = np.zeros((in_c, input_dim, k, k), np.float32)
    for i in range(in_c):
        idk[i, i % input_dim, k // 2, k // 2] = 1.0
    t = bn['gamma'] / jnp.sqrt(bn['var'] + EPS)
    return jnp.asarray(idk) * t[:, None, None, None], bn['beta'] - bn['mean'] * t


def _rep_kernel_bias(p, in_c, out_c, k, groups):
    kernel = jnp.zeros((out_c, in_c // groups, k, k), jnp.float32)
    bias = jnp.zeros((out_c,), jnp.float32)
    for w, bn in p['kxk']:
        kw, kb = _fuse_conv_bn(w, bn)
        kernel, bias = kernel + kw, bias + kb
    if p['conv1x1'] is not None:
        kw, kb = _fuse_conv_bn(*p['conv1x1'])
        pad = k // 2
        kernel = kernel + jnp.pad(kw, ((0, 0), (0, 0), (pad, pad), (pad, pad)))
        bias = bias + kb
    if p['identity'] is not None:
        kw, kb = _identity_kernel_bias(p['identity'], in_c, groups, k)
        kernel, bias = kernel + kw, bias + kb
    return kernel, bias


# ----------------------------- LCNetV3Block forward (single fused pallas_call) -----------------------------

def lcnetv3_block_forward(x_nhwc, params, in_c, out_c, stride, dw_size, use_se):
    """Fused LCNetV3 block. x_nhwc: (N,H,W,C) bf16 NHWC. Returns (N,Ho,Wo,out_c) bf16 NHWC.

    Keep activations NHWC/bf16 across the whole stack — no per-block layout passes.
    """
    x = x_nhwc.astype(jnp.bfloat16)
    N, H, W, C = x.shape
    K = dw_size
    p = (K - 1) // 2
    Ho = (H + 2 * p - K) // stride + 1
    Wo = (W + 2 * p - K) // stride + 1

    # dw LearnableRepLayer -> single folded depthwise kxk kernel; LAB scale/bias folded in.
    kdw, bdw = _rep_kernel_bias(params['dw'], in_c, in_c, K, groups=in_c)
    s_dw, o_dw = params['dw']['lab']
    kdw = kdw * s_dw
    bdw = bdw * s_dw + o_dw
    w_dw = jnp.transpose(kdw[:, 0, :, :], (1, 2, 0)).reshape(K * K, in_c).astype(jnp.bfloat16)
    b_dw = bdw.reshape(1, in_c).astype(jnp.float32)

    # pw LearnableRepLayer -> single folded 1x1 kernel; LAB folded in.
    kpw, bpw = _rep_kernel_bias(params['pw'], in_c, out_c, 1, groups=1)
    s_pw, o_pw = params['pw']['lab']
    w_pw = (jnp.transpose(kpw[:, :, 0, 0], (1, 0)) * s_pw).astype(jnp.bfloat16)
    b_pw = (bpw * s_pw + o_pw).reshape(1, out_c).astype(jnp.float32)

    # post-hardswish LABs (not foldable) as SMEM scalars.
    act4 = jnp.stack([params['dw']['act_lab'][0], params['dw']['act_lab'][1],
                      params['pw']['act_lab'][0], params['pw']['act_lab'][1]]).astype(jnp.float32)

    in_specs = [
        pl.BlockSpec((1, H, W, C), lambda n: (n, 0, 0, 0)),
        pl.BlockSpec((K * K, C), lambda n: (0, 0)),
        pl.BlockSpec((1, C), lambda n: (0, 0)),
    ]
    args = [x, w_dw, b_dw]
    if use_se:
        se = params['se']
        cr = se['w1'].shape[0]
        w1 = jnp.transpose(se['w1'][:, :, 0, 0], (1, 0)).astype(jnp.float32)     # (C, Cr)
        w2 = jnp.transpose(se['w2'][:, :, 0, 0], (1, 0)).astype(jnp.float32)     # (Cr, C)
        in_specs += [pl.BlockSpec((C, cr), lambda n: (0, 0)),
                     pl.BlockSpec((1, cr), lambda n: (0, 0)),
                     pl.BlockSpec((cr, C), lambda n: (0, 0)),
                     pl.BlockSpec((1, C), lambda n: (0, 0))]
        args += [w1, se['b1'].reshape(1, cr).astype(jnp.float32),
                 w2, se['b2'].reshape(1, C).astype(jnp.float32)]
    in_specs += [pl.BlockSpec((C, out_c), lambda n: (0, 0)),
                 pl.BlockSpec((1, out_c), lambda n: (0, 0)),
                 pl.BlockSpec(memory_space=pltpu.MemorySpace.SMEM)]
    args += [w_pw, b_pw, act4]

    flops = 2 * N * Ho * Wo * C * (K * K + out_c)
    out_bytes = N * Ho * Wo * out_c * 2
    bytes_accessed = out_bytes + sum(
        int(np.prod(a.shape)) * a.dtype.itemsize for a in args)

    # Lane-dense output slab: last dim Wo*out_c is a multiple of 128.
    assert (Wo * out_c) % 128 == 0, "pick shapes with lane-dense Wo*out_c"

    out = pl.pallas_call(
        functools.partial(_fused_block_kernel, K=K, stride=stride, use_se=use_se),
        out_shape=jax.ShapeDtypeStruct((N, Ho, Wo * out_c), jnp.bfloat16),
        grid=(N,),
        in_specs=in_specs,
        out_specs=pl.BlockSpec((1, Ho, Wo * out_c), lambda n: (n, 0, 0)),
        scratch_shapes=[pltpu.VMEM((H + 2 * p, W + 2 * p, C), jnp.float32)],
        compiler_params=pltpu.CompilerParams(
            dimension_semantics=("parallel",),
            vmem_limit_bytes=64 * 1024 * 1024),
        cost_estimate=pl.CostEstimate(flops=flops, transcendentals=0,
                                      bytes_accessed=int(bytes_accessed)),
    )(*args)

    return out.reshape(N, Ho, Wo, out_c)          # NHWC bf16 (reshape is free)


# ----------------------------- pure-JAX reference (mirrors PyTorch forward) -----------------------------

def _bn_ref(x, bn):
    g = bn['gamma'][None, :, None, None]
    b = bn['beta'][None, :, None, None]
    m = bn['mean'][None, :, None, None]
    v = bn['var'][None, :, None, None]
    return (x - m) / jnp.sqrt(v + EPS) * g + b


def _conv_ref(x, w, stride, pad, groups):
    return jax.lax.conv_general_dilated(
        x, w, (stride, stride), [(pad, pad), (pad, pad)],
        dimension_numbers=('NCHW', 'OIHW', 'NCHW'), feature_group_count=groups)


def _hardswish(x):
    return x * jnp.clip(x + 3.0, 0.0, 6.0) / 6.0


def _hardsigmoid(x):
    return jnp.clip(x + 3.0, 0.0, 6.0) / 6.0


def _rep_layer_ref(x, p, k, stride, groups):
    pad = (k - 1) // 2
    out = 0.0
    if p['identity'] is not None:
        out = out + _bn_ref(x, p['identity'])
    if p['conv1x1'] is not None:
        w, bn = p['conv1x1']
        out = out + _bn_ref(_conv_ref(x, w, stride, 0, groups), bn)
    for w, bn in p['kxk']:
        out = out + _bn_ref(_conv_ref(x, w, stride, pad, groups), bn)
    out = p['lab'][0] * out + p['lab'][1]
    if stride != 2:
        out = _hardswish(out)
        out = p['act_lab'][0] * out + p['act_lab'][1]
    return out


def _se_ref(x, se):
    pooled = jnp.mean(x, axis=(2, 3), keepdims=True)
    h = _conv_ref(pooled, se['w1'], 1, 0, 1) + se['b1'][None, :, None, None]
    h = jnp.maximum(h, 0.0)
    s = _conv_ref(h, se['w2'], 1, 0, 1) + se['b2'][None, :, None, None]
    return x * _hardsigmoid(s)


def lcnetv3_block_ref(x, params, in_c, out_c, stride, dw_size, use_se):
    y = _rep_layer_ref(x, params['dw'], dw_size, stride, in_c)
    if use_se:
        y = _se_ref(y, params['se'])
    return _rep_layer_ref(y, params['pw'], 1, 1, 1)


# ----------------------------- main -----------------------------

if __name__ == "__main__":
    key = jax.random.PRNGKey(0)
    kx, kp1, kp2, kp3 = jax.random.split(key, 4)

    x_nchw = jax.random.normal(kx, (2, 16, 16, 16), jnp.float32)  # NCHW: N=2, C=16, H=W=16
    ok = True

    # --- standalone LearnableAffineBlock (the spec module) ---
    lab_scale, lab_bias = jnp.float32(1.3), jnp.float32(-0.2)
    lab_out = jax.block_until_ready(learnable_affine_block_forward(x_nchw, lab_scale, lab_bias))
    lab_ref = lab_scale * x_nchw + lab_bias
    if not np.allclose(np.asarray(lab_out), np.asarray(lab_ref), rtol=1e-5, atol=1e-5):
        ok = False
        print("LAB mismatch",
              float(np.max(np.abs(np.asarray(lab_out) - np.asarray(lab_ref)))))

    # --- fused LCNetV3 block (dw rep-conv + LAB/act, SE, pw rep-conv + LAB/act) ---
    # Layout conversion happens ONCE here (stack boundary), not per block.
    x_nhwc = jnp.transpose(x_nchw, (0, 2, 3, 1)).astype(jnp.bfloat16)
    x_q_nchw = x_nchw.astype(jnp.bfloat16).astype(jnp.float32)  # reference sees same bf16 input

    configs = [
        dict(in_c=16, out_c=32, stride=1, dw_size=3, use_se=True),
        dict(in_c=16, out_c=32, stride=2, dw_size=5, use_se=False),
        dict(in_c=16, out_c=32, stride=2, dw_size=5, use_se=True),
    ]
    for cfg, kp in zip(configs, (kp1, kp2, kp3)):
        params = make_lcnetv3_block_params(
            kp, cfg['in_c'], cfg['out_c'], cfg['stride'], cfg['dw_size'], cfg['use_se'])
        out = lcnetv3_block_forward(
            x_nhwc, params, cfg['in_c'], cfg['out_c'], cfg['stride'], cfg['dw_size'], cfg['use_se'])
        out = jax.block_until_ready(out)
        ref = lcnetv3_block_ref(
            x_q_nchw, params, cfg['in_c'], cfg['out_c'], cfg['stride'], cfg['dw_size'], cfg['use_se'])
        out_nchw = jnp.transpose(out.astype(jnp.float32), (0, 3, 1, 2))
        out_f = np.asarray(out_nchw)
        ref_f = np.asarray(ref)
        err = float(np.max(np.abs(out_f - ref_f)))
        scale = max(1.0, float(np.max(np.abs(ref_f))))
        # bf16 storage of activations / fused conv weights + bf16 MXU feed -> small rel budget.
        if err > 2e-2 * scale:
            ok = False
            print("mismatch", cfg, "max_abs_err", err, "ref_scale", scale)

    if ok:
        print("KERNEL_OK")
</pallas_src>

<mosaic_0001>
module attributes {stable_mosaic.version = 11 : i64} {
  func.func @_lab_kernel(%arg0: i32, %arg1: memref<2xf32, #tpu.memory_space<smem>>, %arg2: memref<8x1024xf32, #tpu.memory_space<vmem>>, %arg3: memref<8x1024xf32, #tpu.memory_space<vmem>>) attributes {dimension_semantics = [#tpu.dimension_semantics<parallel>], iteration_bounds = array<i64: 1>, scalar_prefetch = 0 : i64, scratch_operands = 0 : i64, tpu.core_type = #tpu.core_type<tc>, window_params = [{transform_indices = @transform_0, window_bounds = array<i64: 2>}, {transform_indices = @transform_1, window_bounds = array<i64: 8, 1024>}, {transform_indices = @transform_2, window_bounds = array<i64: 8, 1024>}]} {
    %c0 = arith.constant 0 : index
    %c0_0 = arith.constant 0 : index
    %0 = vector.load %arg2[%c0, %c0_0] : memref<8x1024xf32, #tpu.memory_space<vmem>>, vector<8x1024xf32>
    %c0_1 = arith.constant 0 : index
    %1 = memref.load %arg1[%c0_1] : memref<2xf32, #tpu.memory_space<smem>>
    %2 = vector.broadcast %1 : f32 to vector<8x1024xf32>
    %3 = arith.mulf %2, %0 : vector<8x1024xf32>
    %c1 = arith.constant 1 : index
    %4 = memref.load %arg1[%c1] : memref<2xf32, #tpu.memory_space<smem>>
    %5 = vector.broadcast %4 : f32 to vector<8x1024xf32>
    %6 = arith.addf %3, %5 : vector<8x1024xf32>
    %c0_2 = arith.constant 0 : index
    %c0_3 = arith.constant 0 : index
    %7 = vector.load %arg3[%c0_2, %c0_3] : memref<8x1024xf32, #tpu.memory_space<vmem>>, vector<8x1024xf32>
    tpu.vector_store %arg3[%c0_2, %c0_3], %6 {strides = array<i32>} : memref<8x1024xf32, #tpu.memory_space<vmem>>, vector<8x1024xf32>,
    return
  }
  func.func @transform_0(%arg0: i32) -> i32 {
    %c0_i32 = arith.constant 0 : i32
    %c0_i32_0 = arith.constant 0 : i32
    return %c0_i32 : i32
  }
  func.func @transform_1(%arg0: i32) -> (i32, i32) {
    %c0_i32 = arith.constant 0 : i32
    %c0_i32_0 = arith.constant 0 : i32
    return %arg0, %c0_i32 : i32, i32
  }
  func.func @transform_2(%arg0: i32) -> (i32, i32) {
    %c0_i32 = arith.constant 0 : i32
    %c0_i32_0 = arith.constant 0 : i32
    return %arg0, %c0_i32 : i32, i32
  }
}

</mosaic_0001>

<llo_original>
// kernel: tpu_custom_call.1
$region0: #{tpu_custom_call.1}
  #allocation0 [shape = 'u32[]', space=smem, size = 0x4, offset = 0x4, fixed_abs, tag = 'smem constant byte address 0x4 - core index']
  #allocation1 [shape = 'u32[72,128]{1,0:T(1,128)}', space=vmem, size = 0x9000, scoped, tag = 'internal scratch']
  %s0 = inlined_call_operand.hbm [shape: f32[2], index: 0, kind: input, shape index: {}]
  %s1 = inlined_call_operand.hbm [shape: f32[8,1024], index: 1, kind: input, shape index: {}]
  %s2 = inlined_call_operand.hbm [shape: f32[8,1024], index: 2, kind: output, shape index: {}]
  %s3 = sld [smem:[#allocation0]]
  $region26: #{tpu_custom_call.1} parent=0
    _
  %s5 = ssub.s32 1, %s3
  %s6 = scalar_select 0, %s5, %s3
  $region1: #{tpu_custom_call.1} parent=0
    #allocation2 [shape = 'u8[512]{0}', space=smem, size = 0x200, scoped, tag = 'input window, operand 0, single buffered']
    #allocation3 [shape = 's32[1]{0}', space=sflag, size = 0x4, scoped, tag = 'scoped memory for tpu_custom_call.1']
    #allocation4 [shape = 's32[1]{0}', space=sflag, size = 0x4, scoped, tag = 'scoped memory for tpu_custom_call.1']
    #allocation5 [shape = 's32[1]{0}', space=sflag, size = 0x4, scoped, tag = 'scoped memory for tpu_custom_call.1']
    #allocation6 [shape = 'u8[32768]{0}', space=vmem, size = 0x8000, scoped, tag = 'input window, operand 1, single buffered']
    #allocation7 [shape = 'u8[32768]{0}', space=vmem, size = 0x8000, scoped, tag = 'output window, operand 0, single buffered']
    %7 = vsyncpa [#allocation5], 0
    %8 = vsyncpa [#allocation3], 0
    %9 = vsyncpa [#allocation4], 0
    // Predicated region
    $region2: #{tpu_custom_call.1} parent=1 // pred_check
      _
    $region3: #{tpu_custom_call.1} parent=1 // pred_check_branch
      %11 = sbr.rel (0) target = $region5
    $region4: #{tpu_custom_call.1} parent=1 // pred_region
      %13 = vsyncadd [#allocation5], 0
      %s15 = sshll.u32 %s0, 4
      %s16 = int_to_ptr.hbm [resolvable:$true] %s15
      %18 = dma.hbm_to_smem %s16, 16, [#allocation2], [#allocation5]
    $region5: #{tpu_custom_call.1} parent=1 // pred_fallthru
      _
    // Predicated region
    $region6: #{tpu_custom_call.1} parent=1 // pred_check
      _
    $region7: #{tpu_custom_call.1} parent=1 // pred_check_branch
      %20 = sbr.rel (0) target = $region9
    $region8: #{tpu_custom_call.1} parent=1 // pred_region
      %22 = vsyncadd [#allocation3], 0
      %s24 = sshll.u32 %s1, 4
      %s25 = int_to_ptr.hbm [resolvable:$true] %s24
      %s26 = sshll.u32 [#allocation6], 4
      %s27 = int_to_ptr.vmem [resolvable:$true] %s26
      %29 = dma.hbm_to_vmem [thread:$0]  %s25, 1024, %s27, [#allocation3]
    $region9: #{tpu_custom_call.1} parent=1 // pred_fallthru
      _
    // Predicated region
    $region10: #{tpu_custom_call.1} parent=1 // pred_check
      _
    $region11: #{tpu_custom_call.1} parent=1 // pred_check_branch
      %31 = sbr.rel (0) target = $region13
    $region12: #{tpu_custom_call.1} parent=1 // pred_region
      %33 = dma.done [#allocation5], 16
    $region13: #{tpu_custom_call.1} parent=1 // pred_fallthru
      _
    // Predicated region
    $region14: #{tpu_custom_call.1} parent=1 // pred_check
      _
    $region15: #{tpu_custom_call.1} parent=1 // pred_check_branch
      %35 = sbr.rel (0) target = $region17
    $region16: #{tpu_custom_call.1} parent=1 // pred_region
      %37 = dma.done [#allocation3], 1024
    $region17: #{tpu_custom_call.1} parent=1 // pred_fallthru
      _
    %38 = sfence
    %v39 = vld [vmem:[#allocation6] sm:$0xff]
    %v40 = vld [vmem:[#allocation6 + $0x8] sm:$0xff]
    %v41 = vld [vmem:[#allocation6 + $0x10] sm:$0xff]
    %v42 = vld [vmem:[#allocation6 + $0x18] sm:$0xff]
    %v43 = vld [vmem:[#allocation6 + $0x20] sm:$0xff]
    %v44 = vld [vmem:[#allocation6 + $0x28] sm:$0xff]
    %v45 = vld [vmem:[#allocation6 + $0x30] sm:$0xff]
    %v46 = vld [vmem:[#allocation6 + $0x38] sm:$0xff]
    %s47 = sld [smem:[#allocation2]]
    %v48 = vstv %s47
    %v49 = vmul.f32 %v48, %v39
    %v50 = vmul.f32 %v48, %v40
    %v51 = vmul.f32 %v48, %v41
    %v52 = vmul.f32 %v48, %v42
    %v53 = vmul.f32 %v48, %v43
    %v54 = vmul.f32 %v48, %v44
    %v55 = vmul.f32 %v48, %v45
    %v56 = vmul.f32 %v48, %v46
    %s57 = sld [smem:[#allocation2 + $0x1]]
    %v58 = vstv %s57
    %v59 = vadd.f32 %v49, %v58
    %v60 = vadd.f32 %v50, %v58
    %v61 = vadd.f32 %v51, %v58
    %v62 = vadd.f32 %v52, %v58
    %v63 = vadd.f32 %v53, %v58
    %v64 = vadd.f32 %v54, %v58
    %v65 = vadd.f32 %v55, %v58
    %v66 = vadd.f32 %v56, %v58
    %67 = vst [vmem:[#allocation7] sm:$0xff] %v59
    %68 = vst [vmem:[#allocation7 + $0x8] sm:$0xff] %v60
    %69 = vst [vmem:[#allocation7 + $0x10] sm:$0xff] %v61
    %70 = vst [vmem:[#allocation7 + $0x18] sm:$0xff] %v62
    %71 = vst [vmem:[#allocation7 + $0x20] sm:$0xff] %v63
    %72 = vst [vmem:[#allocation7 + $0x28] sm:$0xff] %v64
    %73 = vst [vmem:[#allocation7 + $0x30] sm:$0xff] %v65
    %74 = vst [vmem:[#allocation7 + $0x38] sm:$0xff] %v66
    // Predicated region
    $region18: #{tpu_custom_call.1} parent=1 // pred_check
      _
    $region19: #{tpu_custom_call.1} parent=1 // pred_check_branch
      %76 = sbr.rel (0) target = $region21
    $region20: #{tpu_custom_call.1} parent=1 // pred_region
      %78 = vsyncadd [#allocation4], 0
      %s80 = sshll.u32 [#allocation7], 4
      %s81 = int_to_ptr.vmem [resolvable:$true] %s80
      %s82 = sshll.u32 %s2, 4
      %s83 = int_to_ptr.hbm [resolvable:$true] %s82
      %85 = dma.vmem_to_hbm [thread:$0]  %s81, 1024, %s83, [#allocation4]
    $region21: #{tpu_custom_call.1} parent=1 // pred_fallthru
      _
    // Predicated region
    $region22: #{tpu_custom_call.1} parent=1 // pred_check
      _
    $region23: #{tpu_custom_call.1} parent=1 // pred_check_branch
      %87 = sbr.rel (0) target = $region25
    $region24: #{tpu_custom_call.1} parent=1 // pred_region
      %89 = dma.done [#allocation4], 1024
    $region25: #{tpu_custom_call.1} parent=1 // pred_fallthru
      _
    %90 = vsyncpa [#allocation3], 1
    %91 = vsyncpa [#allocation4], 1
    %92 = vsyncpa [#allocation5], 1

</llo_original>
